<compile_context>
chip_gen: v7x
topology: tpu7x:2x2x1
jax: 0.10.0
libtpu: 0.0.40
codegen_flags: <defaults>
</compile_context>

<pallas_src>
import jax
import jax.numpy as jnp
from jax import lax
from jax.experimental import pallas as pl
from jax.experimental.pallas import tpu as pltpu


# ---------------------------------------------------------------------------
# One-time parameter packing (hoisted out of the per-call hot path).
# ---------------------------------------------------------------------------
def pack_highway_params(w_lin, b_lin, w_gate, b_gate):
    """PyTorch (L, out, in) / (L, out) params -> fused kernel layout.

    Returns:
      w_cat: (L, H, 2H) bf16, columns [0:H] = gate weights, [H:2H] = linear.
      b_cat: (L, 1, 2H) f32 fused biases.
    Call ONCE and cache the result; do not rebuild per forward call.
    """
    L, H, _ = w_lin.shape
    w_cat = jnp.concatenate(
        [jnp.swapaxes(w_gate, -1, -2), jnp.swapaxes(w_lin, -1, -2)], axis=-1
    ).astype(jnp.bfloat16)                                   # (L, H, 2H)
    b_cat = jnp.concatenate([b_gate, b_lin], axis=-1).astype(jnp.float32)
    return w_cat, b_cat.reshape(L, 1, 2 * H)


# ---------------------------------------------------------------------------
# Kernels
# ---------------------------------------------------------------------------
def _highway_resident_kernel(x_ref, w_ref, b_ref, o_ref):
    """Whole fused weight stack resident in VMEM; layers looped in-kernel.

    x_ref: (TB, H)      input activations for this batch tile
    w_ref: (L, H, 2H)   bf16 fused [gate | linear] weight stack (resident)
    b_ref: (L, 1, 2H)   f32 fused biases (resident)
    o_ref: (TB, H)      output tile
    """
    h = x_ref.shape[-1]
    n_layers = w_ref.shape[0]
    x0 = x_ref[...].astype(jnp.float32)

    def body(l, x):
        w = w_ref[l]                                         # (H, 2H) bf16
        b = b_ref[l]                                         # (1, 2H) f32
        z = jnp.dot(x.astype(w.dtype), w,
                    preferred_element_type=jnp.float32) + b  # (TB, 2H) f32
        gate = jax.nn.sigmoid(z[:, :h])
        nonlinear = jnp.maximum(z[:, h:], 0.0)
        return x + gate * (nonlinear - x)                    # == g*nl + (1-g)*x

    x = lax.fori_loop(0, n_layers, body, x0, unroll=True)
    o_ref[...] = x.astype(o_ref.dtype)


def _highway_streamed_kernel(x_ref, w_ref, b_ref, o_ref, x_sc):
    """Fallback: per-layer streamed weights, grid = (batch_tiles, layers).

    x_sc: (TB, H) f32 VMEM carry across the (innermost) layer axis.
    """
    l = pl.program_id(1)
    last = pl.num_programs(1) - 1
    h = x_sc.shape[-1]

    @pl.when(l == 0)
    def _():
        x_sc[...] = x_ref[...].astype(jnp.float32)

    x = x_sc[...]                                            # (TB, H) f32
    w = w_ref[0]                                             # (H, 2H) bf16
    b = b_ref[0]                                             # (1, 2H) f32

    z = jnp.dot(x.astype(w.dtype), w, preferred_element_type=jnp.float32) + b
    gate = jax.nn.sigmoid(z[:, :h])
    nonlinear = jnp.maximum(z[:, h:], 0.0)
    new_x = x + gate * (nonlinear - x)
    x_sc[...] = new_x

    @pl.when(l == last)
    def _():
        o_ref[...] = new_x.astype(o_ref.dtype)


# ---------------------------------------------------------------------------
# Wrapper
# ---------------------------------------------------------------------------
def _vmem_capacity_bytes():
    try:
        return int(pltpu.get_tpu_info().vmem_capacity_bytes)
    except Exception:
        return 64 << 20  # conservative default (v7x per-TensorCore VMEM)


def highway_packed(x, w_cat, b_cat, *, tile_b=None, force_streamed=False):
    """x: (B, H); w_cat: (L, H, 2H) bf16; b_cat: (L, 1, 2H) f32."""
    B, H = x.shape
    L = w_cat.shape[0]
    assert w_cat.shape == (L, H, 2 * H) and b_cat.shape == (L, 1, 2 * H)

    # Generation-aware VMEM budget (~96 MiB on v5e/v6e, ~48 MiB on v7x).
    vmem_budget = int(0.75 * _vmem_capacity_bytes())

    w_stack_bytes = L * H * (2 * H) * 2                      # bf16 stack
    b_stack_bytes = L * 8 * (2 * H) * 4                      # (1,2H) pads to 8 sublanes
    w_layer_bytes = H * (2 * H) * 2
    b_layer_bytes = 8 * (2 * H) * 4

    def tile_need(t, resident):
        io = 2 * 2 * t * H * x.dtype.itemsize                # x & o, double-buffered
        temps = 4 * t * (2 * H) * 4                          # z/gate/relu/blend headroom (f32)
        if resident:
            wt = w_stack_bytes + b_stack_bytes               # single resident copy
        else:
            wt = 2 * (w_layer_bytes + b_layer_bytes) + t * H * 4  # dbl-buffered + carry
        return wt + io + temps

    # Resident-weight path whenever the fused stack fits comfortably in VMEM.
    resident = (not force_streamed) and (tile_need(8, True) <= vmem_budget)
    # TODO(synk): on v7x, add an N-tile over the 2H output dim for H large
    # enough that even the streamed (H, 2H) double-buffered tile overflows VMEM.

    # Batch tile: largest candidate that fits VMEM; cover the batch in one tile
    # when possible, otherwise use the largest fitting tile and pad up to it.
    cands = (1024, 512, 256, 128, 64, 32, 16, 8)
    if tile_b is None:
        fitting = [t for t in cands if tile_need(t, resident) <= vmem_budget] or [8]
        b8 = max(8, -(-B // 8) * 8)
        covering = [t for t in fitting if t >= b8]
        tile_b = min(covering) if covering else max(fitting)

    Bp = -(-B // tile_b) * tile_b                            # pad UP to the tile
    xp = jnp.pad(x, ((0, Bp - B), (0, 0))) if Bp != B else x
    num_b = Bp // tile_b

    need = tile_need(tile_b, resident)
    vmem_limit = int(min(max(2 * need, 16 << 20), vmem_budget))

    if resident:
        out = pl.pallas_call(
            _highway_resident_kernel,
            out_shape=jax.ShapeDtypeStruct((Bp, H), x.dtype),
            grid_spec=pltpu.PrefetchScalarGridSpec(
                num_scalar_prefetch=0,
                grid=(num_b,),
                in_specs=[
                    pl.BlockSpec((tile_b, H), lambda b: (b, 0)),
                    pl.BlockSpec((L, H, 2 * H), lambda b: (0, 0, 0)),   # resident
                    pl.BlockSpec((L, 1, 2 * H), lambda b: (0, 0, 0)),   # resident
                ],
                out_specs=pl.BlockSpec((tile_b, H), lambda b: (b, 0)),
            ),
            compiler_params=pltpu.CompilerParams(
                dimension_semantics=("parallel",),
                vmem_limit_bytes=vmem_limit,
            ),
        )(xp, w_cat, b_cat)
    else:
        out = pl.pallas_call(
            _highway_streamed_kernel,
            out_shape=jax.ShapeDtypeStruct((Bp, H), x.dtype),
            grid_spec=pltpu.PrefetchScalarGridSpec(
                num_scalar_prefetch=0,
                grid=(num_b, L),                              # layer axis innermost
                in_specs=[
                    pl.BlockSpec((tile_b, H), lambda b, l: (b, 0)),
                    pl.BlockSpec((1, H, 2 * H), lambda b, l: (l, 0, 0)),
                    pl.BlockSpec((1, 1, 2 * H), lambda b, l: (l, 0, 0)),
                ],
                out_specs=pl.BlockSpec((tile_b, H), lambda b, l: (b, 0)),
                scratch_shapes=[pltpu.VMEM((tile_b, H), jnp.float32)],
            ),
            compiler_params=pltpu.CompilerParams(
                dimension_semantics=("parallel", "arbitrary"),
                vmem_limit_bytes=vmem_limit,
            ),
        )(xp, w_cat, b_cat)

    return out[:B] if Bp != B else out


def highway(x, w_lin, b_lin, w_gate, b_gate, *, tile_b=None):
    """Convenience wrapper with PyTorch-layout params.

    Prefer pack_highway_params() once + highway_packed() in a hot loop so the
    weight repack is not redone every call.
    """
    w_cat, b_cat = pack_highway_params(w_lin, b_lin, w_gate, b_gate)
    return highway_packed(x, w_cat, b_cat, tile_b=tile_b)


def highway_ref(x, w_lin, b_lin, w_gate, b_gate):
    """Pure-JAX f32 reference matching the PyTorch module."""
    L = w_lin.shape[0]
    for l in range(L):
        gate = jax.nn.sigmoid(x @ w_gate[l].T + b_gate[l])
        nonlinear = jax.nn.relu(x @ w_lin[l].T + b_lin[l])
        x = x + gate * (nonlinear - x)
    return x


if __name__ == "__main__":
    # Small shapes: batch=20 (exercises pad-up-to-tile), hidden=128, 3 layers.
    B, H, L = 20, 128, 3
    key = jax.random.PRNGKey(0)
    kx, k1, k2, k3, k4 = jax.random.split(key, 5)

    bound = 1.0 / (H ** 0.5)  # PyTorch nn.Linear-style uniform init
    x = jax.random.normal(kx, (B, H), dtype=jnp.float32)
    w_lin = jax.random.uniform(k1, (L, H, H), jnp.float32, -bound, bound)
    b_lin = jax.random.uniform(k2, (L, H), jnp.float32, -bound, bound)
    w_gate = jax.random.uniform(k3, (L, H, H), jnp.float32, -bound, bound)
    b_gate = jax.random.uniform(k4, (L, H), jnp.float32, -bound, bound)

    # One-time pack (hoisted out of the per-call hot path).
    w_cat, b_cat = jax.block_until_ready(
        pack_highway_params(w_lin, b_lin, w_gate, b_gate))

    ref = highway_ref(x, w_lin, b_lin, w_gate, b_gate)

    # Primary path: resident weight stack, single-axis grid.
    out = jax.block_until_ready(highway_packed(x, w_cat, b_cat))
    assert out.shape == (B, H)
    # bf16 weights/matmul operands -> looser tolerance than pure f32.
    assert jnp.allclose(out, ref, atol=5e-2, rtol=5e-2), "resident path mismatch"

    # Fallback path (per-layer streamed weights) also validated.
    out_s = jax.block_until_ready(
        highway_packed(x, w_cat, b_cat, force_streamed=True))
    assert jnp.allclose(out_s, ref, atol=5e-2, rtol=5e-2), "streamed path mismatch"

    print("KERNEL_OK")
</pallas_src>

<mosaic_0001>
module attributes {stable_mosaic.version = 11 : i64} {
  func.func @_highway_resident_kernel(%arg0: i32, %arg1: memref<32x128xf32, #tpu.memory_space<vmem>>, %arg2: memref<3x128x256xbf16, #tpu.memory_space<vmem>>, %arg3: memref<3x1x256xf32, #tpu.memory_space<vmem>>, %arg4: memref<32x128xf32, #tpu.memory_space<vmem>>) attributes {dimension_semantics = [#tpu.dimension_semantics<parallel>], iteration_bounds = array<i64: 1>, scalar_prefetch = 0 : i64, scratch_operands = 0 : i64, tpu.core_type = #tpu.core_type<tc>, window_params = [{transform_indices = @transform_0, window_bounds = array<i64: 32, 128>}, {pipeline_mode = #tpu.pipeline_mode<synchronous>, transform_indices = @transform_1, window_bounds = array<i64: 3, 128, 256>}, {pipeline_mode = #tpu.pipeline_mode<synchronous>, transform_indices = @transform_2, window_bounds = array<i64: 3, 1, 256>}, {transform_indices = @transform_3, window_bounds = array<i64: 32, 128>}]} {
    %c0 = arith.constant 0 : index
    %c0_0 = arith.constant 0 : index
    %0 = vector.load %arg1[%c0, %c0_0] : memref<32x128xf32, #tpu.memory_space<vmem>>, vector<32x128xf32>
    %c0_i32 = arith.constant 0 : i32
    %1 = arith.index_cast %c0_i32 : i32 to index
    %c0_1 = arith.constant 0 : index
    %c0_2 = arith.constant 0 : index
    %2 = vector.load %arg2[%1, %c0_1, %c0_2] : memref<3x128x256xbf16, #tpu.memory_space<vmem>>, vector<1x128x256xbf16>
    %3 = vector.shape_cast %2 : vector<1x128x256xbf16> to vector<128x256xbf16>
    %4 = arith.index_cast %c0_i32 : i32 to index
    %c0_3 = arith.constant 0 : index
    %c0_4 = arith.constant 0 : index
    %5 = vector.load %arg3[%4, %c0_3, %c0_4] : memref<3x1x256xf32, #tpu.memory_space<vmem>>, vector<1x1x256xf32>
    %6 = vector.shape_cast %5 : vector<1x1x256xf32> to vector<1x256xf32>
    %7 = arith.truncf %0 : vector<32x128xf32> to vector<32x128xbf16>
    %cst = arith.constant dense<0.000000e+00> : vector<32x256xf32>
    %8 = tpu.matmul %7, %3, %cst {dimension_numbers = #tpu.dot_dimension_numbers<[1], [0], [0], [1], [0, 0, 1, 1], [], []>} : vector<32x128xbf16>, vector<128x256xbf16>, vector<32x256xf32> -> vector<32x256xf32>
    %9 = vector.broadcast %6 : vector<1x256xf32> to vector<32x256xf32>
    %10 = arith.addf %8, %9 : vector<32x256xf32>
    %11 = vector.extract_strided_slice %10 {offsets = [0, 0], sizes = [32, 128], strides = [1, 1]} : vector<32x256xf32> to vector<32x128xf32>
    %12 = arith.negf %11 : vector<32x128xf32>
    %13 = math.exp %12 : vector<32x128xf32>
    %cst_5 = arith.constant 1.000000e+00 : f32
    %14 = vector.broadcast %cst_5 : f32 to vector<32x128xf32>
    %15 = arith.addf %14, %13 : vector<32x128xf32>
    %16 = arith.divf %14, %15 : vector<32x128xf32>
    %17 = vector.extract_strided_slice %10 {offsets = [0, 128], sizes = [32, 128], strides = [1, 1]} : vector<32x256xf32> to vector<32x128xf32>
    %cst_6 = arith.constant 0.000000e+00 : f32
    %18 = vector.broadcast %cst_6 : f32 to vector<32x128xf32>
    %19 = arith.maximumf %17, %18 : vector<32x128xf32>
    %20 = arith.subf %19, %0 : vector<32x128xf32>
    %21 = arith.mulf %16, %20 : vector<32x128xf32>
    %22 = arith.addf %0, %21 : vector<32x128xf32>
    %c1_i32 = arith.constant 1 : i32
    %23 = arith.index_cast %c1_i32 : i32 to index
    %c0_7 = arith.constant 0 : index
    %c0_8 = arith.constant 0 : index
    %24 = vector.load %arg2[%23, %c0_7, %c0_8] : memref<3x128x256xbf16, #tpu.memory_space<vmem>>, vector<1x128x256xbf16>
    %25 = vector.shape_cast %24 : vector<1x128x256xbf16> to vector<128x256xbf16>
    %26 = arith.index_cast %c1_i32 : i32 to index
    %c0_9 = arith.constant 0 : index
    %c0_10 = arith.constant 0 : index
    %27 = vector.load %arg3[%26, %c0_9, %c0_10] : memref<3x1x256xf32, #tpu.memory_space<vmem>>, vector<1x1x256xf32>
    %28 = vector.shape_cast %27 : vector<1x1x256xf32> to vector<1x256xf32>
    %29 = arith.truncf %22 : vector<32x128xf32> to vector<32x128xbf16>
    %cst_11 = arith.constant dense<0.000000e+00> : vector<32x256xf32>
    %30 = tpu.matmul %29, %25, %cst_11 {dimension_numbers = #tpu.dot_dimension_numbers<[1], [0], [0], [1], [0, 0, 1, 1], [], []>} : vector<32x128xbf16>, vector<128x256xbf16>, vector<32x256xf32> -> vector<32x256xf32>
    %31 = vector.broadcast %28 : vector<1x256xf32> to vector<32x256xf32>
    %32 = arith.addf %30, %31 : vector<32x256xf32>
    %33 = vector.extract_strided_slice %32 {offsets = [0, 0], sizes = [32, 128], strides = [1, 1]} : vector<32x256xf32> to vector<32x128xf32>
    %34 = arith.negf %33 : vector<32x128xf32>
    %35 = math.exp %34 : vector<32x128xf32>
    %cst_12 = arith.constant 1.000000e+00 : f32
    %36 = vector.broadcast %cst_12 : f32 to vector<32x128xf32>
    %37 = arith.addf %36, %35 : vector<32x128xf32>
    %38 = arith.divf %36, %37 : vector<32x128xf32>
    %39 = vector.extract_strided_slice %32 {offsets = [0, 128], sizes = [32, 128], strides = [1, 1]} : vector<32x256xf32> to vector<32x128xf32>
    %cst_13 = arith.constant 0.000000e+00 : f32
    %40 = vector.broadcast %cst_13 : f32 to vector<32x128xf32>
    %41 = arith.maximumf %39, %40 : vector<32x128xf32>
    %42 = arith.subf %41, %22 : vector<32x128xf32>
    %43 = arith.mulf %38, %42 : vector<32x128xf32>
    %44 = arith.addf %22, %43 : vector<32x128xf32>
    %c2_i32 = arith.constant 2 : i32
    %45 = arith.index_cast %c2_i32 : i32 to index
    %c0_14 = arith.constant 0 : index
    %c0_15 = arith.constant 0 : index
    %46 = vector.load %arg2[%45, %c0_14, %c0_15] : memref<3x128x256xbf16, #tpu.memory_space<vmem>>, vector<1x128x256xbf16>
    %47 = vector.shape_cast %46 : vector<1x128x256xbf16> to vector<128x256xbf16>
    %48 = arith.index_cast %c2_i32 : i32 to index
    %c0_16 = arith.constant 0 : index
    %c0_17 = arith.constant 0 : index
    %49 = vector.load %arg3[%48, %c0_16, %c0_17] : memref<3x1x256xf32, #tpu.memory_space<vmem>>, vector<1x1x256xf32>
    %50 = vector.shape_cast %49 : vector<1x1x256xf32> to vector<1x256xf32>
    %51 = arith.truncf %44 : vector<32x128xf32> to vector<32x128xbf16>
    %cst_18 = arith.constant dense<0.000000e+00> : vector<32x256xf32>
    %52 = tpu.matmul %51, %47, %cst_18 {dimension_numbers = #tpu.dot_dimension_numbers<[1], [0], [0], [1], [0, 0, 1, 1], [], []>} : vector<32x128xbf16>, vector<128x256xbf16>, vector<32x256xf32> -> vector<32x256xf32>
    %53 = vector.broadcast %50 : vector<1x256xf32> to vector<32x256xf32>
    %54 = arith.addf %52, %53 : vector<32x256xf32>
    %55 = vector.extract_strided_slice %54 {offsets = [0, 0], sizes = [32, 128], strides = [1, 1]} : vector<32x256xf32> to vector<32x128xf32>
    %56 = arith.negf %55 : vector<32x128xf32>
    %57 = math.exp %56 : vector<32x128xf32>
    %cst_19 = arith.constant 1.000000e+00 : f32
    %58 = vector.broadcast %cst_19 : f32 to vector<32x128xf32>
    %59 = arith.addf %58, %57 : vector<32x128xf32>
    %60 = arith.divf %58, %59 : vector<32x128xf32>
    %61 = vector.extract_strided_slice %54 {offsets = [0, 128], sizes = [32, 128], strides = [1, 1]} : vector<32x256xf32> to vector<32x128xf32>
    %cst_20 = arith.constant 0.000000e+00 : f32
    %62 = vector.broadcast %cst_20 : f32 to vector<32x128xf32>
    %63 = arith.maximumf %61, %62 : vector<32x128xf32>
    %64 = arith.subf %63, %44 : vector<32x128xf32>
    %65 = arith.mulf %60, %64 : vector<32x128xf32>
    %66 = arith.addf %44, %65 : vector<32x128xf32>
    %c3_i32 = arith.constant 3 : i32
    %c0_21 = arith.constant 0 : index
    %c0_22 = arith.constant 0 : index
    %67 = vector.load %arg4[%c0_21, %c0_22] : memref<32x128xf32, #tpu.memory_space<vmem>>, vector<32x128xf32>
    tpu.vector_store %arg4[%c0_21, %c0_22], %66 {strides = array<i32>} : memref<32x128xf32, #tpu.memory_space<vmem>>, vector<32x128xf32>,
    return
  }
  func.func @transform_0(%arg0: i32) -> (i32, i32) {
    %c0_i32 = arith.constant 0 : i32
    %c0_i32_0 = arith.constant 0 : i32
    return %arg0, %c0_i32 : i32, i32
  }
  func.func @transform_1(%arg0: i32) -> (i32, i32, i32) {
    %c0_i32 = arith.constant 0 : i32
    %c0_i32_0 = arith.constant 0 : i32
    %c0_i32_1 = arith.constant 0 : i32
    %c0_i32_2 = arith.constant 0 : i32
    return %c0_i32, %c0_i32_0, %c0_i32_1 : i32, i32, i32
  }
  func.func @transform_2(%arg0: i32) -> (i32, i32, i32) {
    %c0_i32 = arith.constant 0 : i32
    %c0_i32_0 = arith.constant 0 : i32
    %c0_i32_1 = arith.constant 0 : i32
    %c0_i32_2 = arith.constant 0 : i32
    return %c0_i32, %c0_i32_0, %c0_i32_1 : i32, i32, i32
  }
  func.func @transform_3(%arg0: i32) -> (i32, i32) {
    %c0_i32 = arith.constant 0 : i32
    %c0_i32_0 = arith.constant 0 : i32
    return %arg0, %c0_i32 : i32, i32
  }
}

</mosaic_0001>

<llo_original>
// kernel: tpu_custom_call.1
$region0: #{tpu_custom_call.1}
  #allocation0 [shape = 'u32[]', space=smem, size = 0x4, offset = 0x4, fixed_abs, tag = 'smem constant byte address 0x4 - core index']
  #allocation1 [shape = 'u32[144,128]{1,0:T(1,128)}', space=vmem, size = 0x12000, scoped, tag = 'internal scratch']
  %s0 = inlined_call_operand.hbm [shape: f32[32,128], index: 0, kind: input, shape index: {}]
  %s1 = inlined_call_operand.hbm [shape: bf16[3,128,256], index: 1, kind: input, shape index: {}]
  %s2 = inlined_call_operand.vmem [shape: f32[3,1,256], index: 2, kind: input, shape index: {}]
  %s3 = inlined_call_operand.hbm [shape: f32[32,128], index: 3, kind: output, shape index: {}]
  %s4 = sld [smem:[#allocation0]]
  $region30: #{tpu_custom_call.1} parent=0
    _
  %s6 = ssub.s32 1, %s4
  %s7 = scalar_select 0, %s6, %s4
  $region1: #{tpu_custom_call.1} parent=0
    #allocation2 [shape = 'u8[16384]{0}', space=vmem, size = 0x4000, scoped, tag = 'input window, operand 0, single buffered']
    #allocation3 [shape = 's32[1]{0}', space=sflag, size = 0x4, scoped, tag = 'scoped memory for tpu_custom_call.1']
    #allocation4 [shape = 's32[1]{0}', space=sflag, size = 0x4, scoped, tag = 'scoped memory for tpu_custom_call.1']
    #allocation5 [shape = 'u8[196608]{0}', space=vmem, size = 0x30000, scoped, tag = 'input window, operand 1, single buffered']
    #allocation6 [shape = 's32[1]{0}', space=sflag, size = 0x4, scoped, tag = 'scoped memory for tpu_custom_call.1']
    #allocation7 [shape = 'u8[16384]{0}', space=vmem, size = 0x4000, scoped, tag = 'output window, operand 0, single buffered']
    %8 = vsyncpa [#allocation3], 0
    %9 = vsyncpa [#allocation6], 0
    %10 = vsyncpa [#allocation4], 0
    // Predicated region
    $region2: #{tpu_custom_call.1} parent=1 // pred_check
      _
    $region3: #{tpu_custom_call.1} parent=1 // pred_check_branch
      %12 = sbr.rel (0) target = $region5
    $region4: #{tpu_custom_call.1} parent=1 // pred_region
      %s14 = ssub.s32 512, 512
      %15 = vsyncadd [#allocation3], %s14
      %s16 = sshll.u32 [#allocation2], 4
      %s17 = int_to_ptr.vmem [resolvable:$true] %s16
      %22 = dma.hbm_to_vmem [thread:$0]  %s0, 512, %s17, [#allocation3], 128, 128, 8
    $region5: #{tpu_custom_call.1} parent=1 // pred_fallthru
      _
    // Predicated region
    $region6: #{tpu_custom_call.1} parent=1 // pred_check
      _
    $region7: #{tpu_custom_call.1} parent=1 // pred_check_branch
      %24 = sbr.rel (0) target = $region9
    $region8: #{tpu_custom_call.1} parent=1 // pred_region
      %s26 = ssub.s32 6144, 6144
      %27 = vsyncadd [#allocation6], %s26
      %s28 = sshll.u32 [#allocation5], 4
      %s29 = int_to_ptr.vmem [resolvable:$true] %s28
      %34 = dma.hbm_to_vmem [thread:$0]  %s1, 6144, %s29, [#allocation6], 128, 128, 8
    $region9: #{tpu_custom_call.1} parent=1 // pred_fallthru
      _
    // Predicated region
    $region10: #{tpu_custom_call.1} parent=1 // pred_check
      _
    $region11: #{tpu_custom_call.1} parent=1 // pred_check_branch
      %36 = sbr.rel (0) target = $region13
    $region12: #{tpu_custom_call.1} parent=1 // pred_region
      _
    $region13: #{tpu_custom_call.1} parent=1 // pred_fallthru
      _
    // Predicated region
    $region14: #{tpu_custom_call.1} parent=1 // pred_check
      _
    $region15: #{tpu_custom_call.1} parent=1 // pred_check_branch
      %38 = sbr.rel (0) target = $region17
    $region16: #{tpu_custom_call.1} parent=1 // pred_region
      %39 = dma.done [#allocation3], 512
    $region17: #{tpu_custom_call.1} parent=1 // pred_fallthru
      _
    // Predicated region
    $region18: #{tpu_custom_call.1} parent=1 // pred_check
      _
    $region19: #{tpu_custom_call.1} parent=1 // pred_check_branch
      %41 = sbr.rel (0) target = $region21
    $region20: #{tpu_custom_call.1} parent=1 // pred_region
      %42 = dma.done [#allocation6], 6144
    $region21: #{tpu_custom_call.1} parent=1 // pred_fallthru
      _
    %v44 = vld [vmem:[#allocation2] sm:$0xff]
    %v45 = vld [vmem:[#allocation2 + $0x8] sm:$0xff]
    %v46 = vld [vmem:[#allocation2 + $0x10] sm:$0xff]
    %v47 = vld [vmem:[#allocation2 + $0x18] sm:$0xff]
    %v48 = vld [vmem:[#allocation5] sm:$0xff]
    %v49 = vld [vmem:[#allocation5 + $0x8] sm:$0xff]
    %v50 = vld [vmem:[#allocation5 + $0x10] sm:$0xff]
    %v51 = vld [vmem:[#allocation5 + $0x18] sm:$0xff]
    %v52 = vld [vmem:[#allocation5 + $0x20] sm:$0xff]
    %v53 = vld [vmem:[#allocation5 + $0x28] sm:$0xff]
    %v54 = vld [vmem:[#allocation5 + $0x30] sm:$0xff]
    %v55 = vld [vmem:[#allocation5 + $0x38] sm:$0xff]
    %v56 = vld [vmem:[#allocation5 + $0x40] sm:$0xff]
    %v57 = vld [vmem:[#allocation5 + $0x48] sm:$0xff]
    %v58 = vld [vmem:[#allocation5 + $0x50] sm:$0xff]
    %v59 = vld [vmem:[#allocation5 + $0x58] sm:$0xff]
    %v60 = vld [vmem:[#allocation5 + $0x60] sm:$0xff]
    %v61 = vld [vmem:[#allocation5 + $0x68] sm:$0xff]
    %v62 = vld [vmem:[#allocation5 + $0x70] sm:$0xff]
    %v63 = vld [vmem:[#allocation5 + $0x78] sm:$0xff]
    %v64 = vld [vmem:[%s2] sm:$0x3]
    %v65 = vpack.c.bf16 %v45, %v44
    %v66 = vpack.c.bf16 %v47, %v46
    %v68 = vlaneseq
    %v69 = vshrl.u32 %v68, 7
    %v70 = vsub.s32 0, %v69
    %v71 = vrot.slane %v64, %v70
    %v72 = vlaneseq
    %v73 = vshrl.u32 %v72, 7
    %v74 = vsub.s32 1, %v73
    %v75 = vrot.slane %v64, %v74
    %v94 = vunpack.c.l.b16 %v48
    %v95 = vunpack.c.h.b16 %v48
    %v96 = vunpack.c.l.b16 %v49
    %v97 = vunpack.c.h.b16 %v49
    %v98 = vunpack.c.l.b16 %v50
    %v99 = vunpack.c.h.b16 %v50
    %v100 = vunpack.c.l.b16 %v51
    %v101 = vunpack.c.h.b16 %v51
    %v102 = vunpack.c.l.b16 %v52
    %v103 = vunpack.c.h.b16 %v52
    %v104 = vunpack.c.l.b16 %v53
    %v105 = vunpack.c.h.b16 %v53
    %v106 = vunpack.c.l.b16 %v54
    %v107 = vunpack.c.h.b16 %v54
    %v108 = vunpack.c.l.b16 %v55
    %v109 = vunpack.c.h.b16 %v55
    %v110 = vunpack.c.l.b16 %v56
    %v111 = vunpack.c.h.b16 %v56
    %v112 = vunpack.c.l.b16 %v57
    %v113 = vunpack.c.h.b16 %v57
    %v114 = vunpack.c.l.b16 %v58
    %v115 = vunpack.c.h.b16 %v58
    %v116 = vunpack.c.l.b16 %v59
    %v117 = vunpack.c.h.b16 %v59
    %v118 = vunpack.c.l.b16 %v60
    %v119 = vunpack.c.h.b16 %v60
    %v120 = vunpack.c.l.b16 %v61
    %v121 = vunpack.c.h.b16 %v61
    %v122 = vunpack.c.l.b16 %v62
    %v123 = vunpack.c.h.b16 %v62
    %v124 = vunpack.c.l.b16 %v63
    %v125 = vunpack.c.h.b16 %v63
    %v126 = vpack.c.b16 %v96, %v94
    %v127 = vpack.c.b16 %v97, %v95
    %v128 = vpack.c.b16 %v100, %v98
    %v129 = vpack.c.b16 %v101, %v99
    %v130 = vpack.c.b16 %v104, %v102
    %v131 = vpack.c.b16 %v105, %v103
    %v132 = vpack.c.b16 %v108, %v106
    %v133 = vpack.c.b16 %v109, %v107
    %v134 = vpack.c.b16 %v112, %v110
    %v135 = vpack.c.b16 %v113, %v111
    %v136 = vpack.c.b16 %v116, %v114
    %v137 = vpack.c.b16 %v117, %v115
    %v138 = vpack.c.b16 %v120, %v118
    %v139 = vpack.c.b16 %v121, %v119
    %v140 = vpack.c.b16 %v124, %v122
    %v141 = vpack.c.b16 %v125, %v123
    %158 = vmatprep.subr.bf16.mxu0 %v127
    %159 = vmatpush1.bf16.msra.mxu0 %v126
    %160 = vmatprep.subr.bf16.mxu0 %v129
    %161 = vmatpush1.bf16.msra.mxu0 %v128
    %162 = vmatprep.subr.bf16.mxu0 %v131
    %163 = vmatpush1.bf16.msra.mxu0 %v130
    %164 = vmatprep.subr.bf16.mxu0 %v133
    %165 = vmatpush1.bf16.msra.mxu0 %v132
    %166 = vmatprep.subr.bf16.mxu0 %v135
    %167 = vmatpush1.bf16.msra.mxu0 %v134
    %168 = vmatprep.subr.bf16.mxu0 %v137
    %169 = vmatpush1.bf16.msra.mxu0 %v136
    %170 = vmatprep.subr.bf16.mxu0 %v139
    %171 = vmatpush1.bf16.msra.mxu0 %v138
    %172 = vmatprep.subr.bf16.mxu0 %v141
    %173 = vmatpush1.bf16.msra.mxu0 %v140
    %174 = vmatprep.subr.bf16.mxu0 0
    %175 = vmatpush1.bf16.msra.mxu0 0
    %176 = vmatprep.subr.bf16.mxu0 0
    %177 = vmatpush1.bf16.msra.mxu0 0
    %178 = vmatprep.subr.bf16.mxu0 0
    %179 = vmatpush1.bf16.msra.mxu0 0
    %180 = vmatprep.subr.bf16.mxu0 0
    %181 = vmatpush1.bf16.msra.mxu0 0
    %182 = vmatprep.subr.bf16.mxu0 0
    %183 = vmatpush1.bf16.msra.mxu0 0
    %184 = vmatprep.subr.bf16.mxu0 0
    %185 = vmatpush1.bf16.msra.mxu0 0
    %186 = vmatprep.subr.bf16.mxu0 0
    %187 = vmatpush1.bf16.msra.mxu0 0
    %188 = vmatprep.subr.bf16.mxu0 0
    %189 = vmatpush1.bf16.msra.mxu0 0
    %190 = vmatprep.mubr.bf16.mxu0 0
    %191 = vmatmul.mubr.bf16.gmra.mrb[0].mxu0 %v65
    %v192 = vpop.f32.mrb[0].mxu0
    %v193 = vadd.f32 %v71, %v192
    %v194 = vpop.f32.mrb[0].mxu0
    %v195 = vadd.f32 %v75, %v194
    %v196 = vpop.f32.mrb[0].mxu0
    %v197 = vadd.f32 %v71, %v196
    %v198 = vpop.f32.mrb[0].mxu0
    %v199 = vadd.f32 %v75, %v198
    %200 = vmatprep.mubr.bf16.mxu0 0
    %201 = vmatmul.mubr.bf16.gmra.mrb[0].mxu0 %v66
    %v202 = vpop.f32.mrb[0].mxu0
    %v203 = vadd.f32 %v71, %v202
    %v204 = vpop.f32.mrb[0].mxu0
    %v205 = vadd.f32 %v75, %v204
    %v206 = vpop.f32.mrb[0].mxu0
    %v207 = vadd.f32 %v71, %v206
    %v208 = vpop.f32.mrb[0].mxu0
    %v209 = vadd.f32 %v75, %v208
    %210 = vdwg.mxu0
    %v211 = vxor.u32 %v193, 2147483648
    %v212 = vxor.u32 %v197, 2147483648
    %v213 = vxor.u32 %v203, 2147483648
    %v214 = vxor.u32 %v207, 2147483648
    %v215 = vmul.f32 %v211, 1.442695
    %v216 = vpow.pop %v215
    %v217 = vmul.f32 %v212, 1.442695
    %v218 = vpow.pop %v217
    %v219 = vmul.f32 %v213, 1.442695
    %v220 = vpow.pop %v219
    %v221 = vmul.f32 %v214, 1.442695
    %v222 = vpow.pop %v221
    %v223 = vadd.f32 %v216, 1.0
    %v224 = vadd.f32 %v218, 1.0
    %v225 = vadd.f32 %v220, 1.0
    %v226 = vadd.f32 %v222, 1.0
    %v227 = vrcp.pop %v223
    %v228 = vmul.f32 1.0, %v227
    %v229 = vrcp.pop %v224
    %v230 = vmul.f32 1.0, %v229
    %v231 = vrcp.pop %v225
    %v232 = vmul.f32 1.0, %v231
    %v233 = vrcp.pop %v226
    %v234 = vmul.f32 1.0, %v233
    %v235 = vmax.f32 %v195, 0.0
    %v236 = vmax.f32 %v199, 0.0
    %v237 = vmax.f32 %v205, 0.0
    %v238 = vmax.f32 %v209, 0.0
    %v239 = vsub.f32 %v235, %v44
    %v240 = vsub.f32 %v236, %v45
    %v241 = vsub.f32 %v237, %v46
    %v242 = vsub.f32 %v238, %v47
    %v243 = vmul.f32 %v228, %v239
    %v244 = vmul.f32 %v230, %v240
    %v245 = vmul.f32 %v232, %v241
    %v246 = vmul.f32 %v234, %v242
    %v247 = vadd.f32 %v44, %v243
    %v248 = vadd.f32 %v45, %v244
    %v249 = vadd.f32 %v46, %v245
    %v250 = vadd.f32 %v47, %v246
    %s251 = scalar_lea.vmem [#allocation5], 128
    %v252 = vld [vmem:[%s251] sm:$0xff]
    %v253 = vld [vmem:[%s251 + $0x8] sm:$0xff]
    %v254 = vld [vmem:[%s251 + $0x10] sm:$0xff]
    %v255 = vld [vmem:[%s251 + $0x18] sm:$0xff]
    %v256 = vld [vmem:[%s251 + $0x20] sm:$0xff]
    %v257 = vld [vmem:[%s251 + $0x28] sm:$0xff]
    %v258 = vld [vmem:[%s251 + $0x30] sm:$0xff]
    %v259 = vld [vmem:[%s251 + $0x38] sm:$0xff]
    %v260 = vld [vmem:[%s251 + $0x40] sm:$0xff]
    %v261 = vld [vmem:[%s251 + $0x48] sm:$0xff]
    %v262 = vld [vmem:[%s251 + $0x50] sm:$0xff]
    %v263 = vld [vmem:[%s251 + $0x58] sm:$0xff]
    %v264 = vld [vmem:[%s251 + $0x60] sm:$0xff]
    %v265 = vld [vmem:[%s251 + $0x68] sm:$0xff]
    %v266 = vld [vmem:[%s251 + $0x70] sm:$0xff]
    %v267 = vld [vmem:[%s251 + $0x78] sm:$0xff]
    %s268 = scalar_lea.vmem %s2, 2
    %v269 = vld [vmem:[%s268] sm:$0x3]
    %v270 = vpack.c.bf16 %v248, %v247
    %v271 = vpack.c.bf16 %v250, %v249
    %v273 = vlaneseq
    %v274 = vshrl.u32 %v273, 7
    %v275 = vsub.s32 0, %v274
    %v276 = vrot.slane %v269, %v275
    %v277 = vlaneseq
    %v278 = vshrl.u32 %v277, 7
    %v279 = vsub.s32 1, %v278
    %v280 = vrot.slane %v269, %v279
    %v299 = vunpack.c.l.b16 %v252
    %v300 = vunpack.c.h.b16 %v252
    %v301 = vunpack.c.l.b16 %v253
    %v302 = vunpack.c.h.b16 %v253
    %v303 = vunpack.c.l.b16 %v254
    %v304 = vunpack.c.h.b16 %v254
    %v305 = vunpack.c.l.b16 %v255
    %v306 = vunpack.c.h.b16 %v255
    %v307 = vunpack.c.l.b16 %v256
    %v308 = vunpack.c.h.b16 %v256
    %v309 = vunpack.c.l.b16 %v257
    %v310 = vunpack.c.h.b16 %v257
    %v311 = vunpack.c.l.b16 %v258
    %v312 = vunpack.c.h.b16 %v258
    %v313 = vunpack.c.l.b16 %v259
    %v314 = vunpack.c.h.b16 %v259
    %v315 = vunpack.c.l.b16 %v260
    %v316 = vunpack.c.h.b16 %v260
    %v317 = vunpack.c.l.b16 %v261
    %v318 = vunpack.c.h.b16 %v261
    %v319 = vunpack.c.l.b16 %v262
    %v320 = vunpack.c.h.b16 %v262
    %v321 = vunpack.c.l.b16 %v263
    %v322 = vunpack.c.h.b16 %v263
    %v323 = vunpack.c.l.b16 %v264
    %v324 = vunpack.c.h.b16 %v264
    %v325 = vunpack.c.l.b16 %v265
    %v326 = vunpack.c.h.b16 %v265
    %v327 = vunpack.c.l.b16 %v266
    %v328 = vunpack.c.h.b16 %v266
    %v329 = vunpack.c.l.b16 %v267
    %v330 = vunpack.c.h.b16 %v267
    %v331 = vpack.c.b16 %v301, %v299
    %v332 = vpack.c.b16 %v302, %v300
    %v333 = vpack.c.b16 %v305, %v303
    %v334 = vpack.c.b16 %v306, %v304
    %v335 = vpack.c.b16 %v309, %v307
    %v336 = vpack.c.b16 %v310, %v308
    %v337 = vpack.c.b16 %v313, %v311
    %v338 = vpack.c.b16 %v314, %v312
    %v339 = vpack.c.b16 %v317, %v315
    %v340 = vpack.c.b16 %v318, %v316
    %v341 = vpack.c.b16 %v321, %v319
    %v342 = vpack.c.b16 %v322, %v320
    %v343 = vpack.c.b16 %v325, %v323
    %v344 = vpack.c.b16 %v326, %v324
    %v345 = vpack.c.b16 %v329, %v327
    %v346 = vpack.c.b16 %v330, %v328
    %363 = vmatprep.subr.bf16.mxu0 %v332
    %364 = vmatpush1.bf16.msra.mxu0 %v331
    %365 = vmatprep.subr.bf16.mxu0 %v334
    %366 = vmatpush1.bf16.msra.mxu0 %v333
    %367 = vmatprep.subr.bf16.mxu0 %v336
    %368 = vmatpush1.bf16.msra.mxu0 %v335
    %369 = vmatprep.subr.bf16.mxu0 %v338
    %370 = vmatpush1.bf16.msra.mxu0 %v337
    %371 = vmatprep.subr.bf16.mxu0 %v340
    %372 = vmatpush1.bf16.msra.mxu0 %v339
    %373 = vmatprep.subr.bf16.mxu0 %v342
    %374 = vmatpush1.bf16.msra.mxu0 %v341
    %375 = vmatprep.subr.bf16.mxu0 %v344
    %376 = vmatpush1.bf16.msra.mxu0 %v343
    %377 = vmatprep.subr.bf16.mxu0 %v346
    %378 = vmatpush1.bf16.msra.mxu0 %v345
    %379 = vmatprep.subr.bf16.mxu0 0
    %380 = vmatpush1.bf16.msra.mxu0 0
    %381 = vmatprep.subr.bf16.mxu0 0
    %382 = vmatpush1.bf16.msra.mxu0 0
    %383 = vmatprep.subr.bf16.mxu0 0
    %384 = vmatpush1.bf16.msra.mxu0 0
    %385 = vmatprep.subr.bf16.mxu0 0
    %386 = vmatpush1.bf16.msra.mxu0 0
    %387 = vmatprep.subr.bf16.mxu0 0
    %388 = vmatpush1.bf16.msra.mxu0 0
    %389 = vmatprep.subr.bf16.mxu0 0
    %390 = vmatpush1.bf16.msra.mxu0 0
    %391 = vmatprep.subr.bf16.mxu0 0
    %392 = vmatpush1.bf16.msra.mxu0 0
    %393 = vmatprep.subr.bf16.mxu0 0
    %394 = vmatpush1.bf16.msra.mxu0 0
    %395 = vmatprep.mubr.bf16.mxu0 0
    %396 = vmatmul.mubr.bf16.gmra.mrb[0].mxu0 %v270
    %v397 = vpop.f32.mrb[0].mxu0
    %v398 = vadd.f32 %v276, %v397
    %v399 = vpop.f32.mrb[0].mxu0
    %v400 = vadd.f32 %v280, %v399
    %v401 = vpop.f32.mrb[0].mxu0
    %v402 = vadd.f32 %v276, %v401
    %v403 = vpop.f32.mrb[0].mxu0
    %v404 = vadd.f32 %v280, %v403
    %405 = vmatprep.mubr.bf16.mxu0 0
    %406 = vmatmul.mubr.bf16.gmra.mrb[0].mxu0 %v271
    %v407 = vpop.f32.mrb[0].mxu0
    %v408 = vadd.f32 %v276, %v407
    %v409 = vpop.f32.mrb[0].mxu0
    %v410 = vadd.f32 %v280, %v409
    %v411 = vpop.f32.mrb[0].mxu0
    %v412 = vadd.f32 %v276, %v411
    %v413 = vpop.f32.mrb[0].mxu0
    %v414 = vadd.f32 %v280, %v413
    %415 = vdwg.mxu0
    %v416 = vxor.u32 %v398, 2147483648
    %v417 = vxor.u32 %v402, 2147483648
    %v418 = vxor.u32 %v408, 2147483648
    %v419 = vxor.u32 %v412, 2147483648
    %v420 = vmul.f32 %v416, 1.442695
    %v421 = vpow.pop %v420
    %v422 = vmul.f32 %v417, 1.442695
    %v423 = vpow.pop %v422
    %v424 = vmul.f32 %v418, 1.442695
    %v425 = vpow.pop %v424
    %v426 = vmul.f32 %v419, 1.442695
    %v427 = vpow.pop %v426
    %v428 = vadd.f32 %v421, 1.0
    %v429 = vadd.f32 %v423, 1.0
    %v430 = vadd.f32 %v425, 1.0
    %v431 = vadd.f32 %v427, 1.0
    %v432 = vrcp.pop %v428
    %v433 = vmul.f32 1.0, %v432
    %v434 = vrcp.pop %v429
    %v435 = vmul.f32 1.0, %v434
    %v436 = vrcp.pop %v430
    %v437 = vmul.f32 1.0, %v436
    %v438 = vrcp.pop %v431
    %v439 = vmul.f32 1.0, %v438
    %v440 = vmax.f32 %v400, 0.0
    %v441 = vmax.f32 %v404, 0.0
    %v442 = vmax.f32 %v410, 0.0
    %v443 = vmax.f32 %v414, 0.0
    %v444 = vsub.f32 %v440, %v247
    %v445 = vsub.f32 %v441, %v248
    %v446 = vsub.f32 %v442, %v249
    %v447 = vsub.f32 %v443, %v250
    %v448 = vmul.f32 %v433, %v444
    %v449 = vmul.f32 %v435, %v445
    %v450 = vmul.f32 %v437, %v446
    %v451 = vmul.f32 %v439, %v447
    %v452 = vadd.f32 %v247, %v448
    %v453 = vadd.f32 %v248, %v449
    %v454 = vadd.f32 %v249, %v450
    %v455 = vadd.f32 %v250, %v451
    %s456 = scalar_lea.vmem [#allocation5], 256
    %v457 = vld [vmem:[%s456] sm:$0xff]
    %v458 = vld [vmem:[%s456 + $0x8] sm:$0xff]
    %v459 = vld [vmem:[%s456 + $0x10] sm:$0xff]
    %v460 = vld [vmem:[%s456 + $0x18] sm:$0xff]
    %v461 = vld [vmem:[%s456 + $0x20] sm:$0xff]
    %v462 = vld [vmem:[%s456 + $0x28] sm:$0xff]
    %v463 = vld [vmem:[%s456 + $0x30] sm:$0xff]
    %v464 = vld [vmem:[%s456 + $0x38] sm:$0xff]
    %v465 = vld [vmem:[%s456 + $0x40] sm:$0xff]
    %v466 = vld [vmem:[%s456 + $0x48] sm:$0xff]
    %v467 = vld [vmem:[%s456 + $0x50] sm:$0xff]
    %v468 = vld [vmem:[%s456 + $0x58] sm:$0xff]
    %v469 = vld [vmem:[%s456 + $0x60] sm:$0xff]
    %v470 = vld [vmem:[%s456 + $0x68] sm:$0xff]
    %v471 = vld [vmem:[%s456 + $0x70] sm:$0xff]
    %v472 = vld [vmem:[%s456 + $0x78] sm:$0xff]
    %s473 = scalar_lea.vmem %s2, 4
    %v474 = vld [vmem:[%s473] sm:$0x3]
    %v475 = vpack.c.bf16 %v453, %v452
    %v476 = vpack.c.bf16 %v455, %v454
    %v478 = vlaneseq
    %v479 = vshrl.u32 %v478, 7
    %v480 = vsub.s32 0, %v479
    %v481 = vrot.slane %v474, %v480
    %v482 = vlaneseq
    %v483 = vshrl.u32 %v482, 7
    %v484 = vsub.s32 1, %v483
    %v485 = vrot.slane %v474, %v484
    %v504 = vunpack.c.l.b16 %v457
    %v505 = vunpack.c.h.b16 %v457
    %v506 = vunpack.c.l.b16 %v458
    %v507 = vunpack.c.h.b16 %v458
    %v508 = vunpack.c.l.b16 %v459
    %v509 = vunpack.c.h.b16 %v459
    %v510 = vunpack.c.l.b16 %v460
    %v511 = vunpack.c.h.b16 %v460
    %v512 = vunpack.c.l.b16 %v461
    %v513 = vunpack.c.h.b16 %v461
    %v514 = vunpack.c.l.b16 %v462
    %v515 = vunpack.c.h.b16 %v462
    %v516 = vunpack.c.l.b16 %v463
    %v517 = vunpack.c.h.b16 %v463
    %v518 = vunpack.c.l.b16 %v464
    %v519 = vunpack.c.h.b16 %v464
    %v520 = vunpack.c.l.b16 %v465
    %v521 = vunpack.c.h.b16 %v465
    %v522 = vunpack.c.l.b16 %v466
    %v523 = vunpack.c.h.b16 %v466
    %v524 = vunpack.c.l.b16 %v467
    %v525 = vunpack.c.h.b16 %v467
    %v526 = vunpack.c.l.b16 %v468
    %v527 = vunpack.c.h.b16 %v468
    %v528 = vunpack.c.l.b16 %v469
    %v529 = vunpack.c.h.b16 %v469
    %v530 = vunpack.c.l.b16 %v470
    %v531 = vunpack.c.h.b16 %v470
    %v532 = vunpack.c.l.b16 %v471
    %v533 = vunpack.c.h.b16 %v471
    %v534 = vunpack.c.l.b16 %v472
    %v535 = vunpack.c.h.b16 %v472
    %v536 = vpack.c.b16 %v506, %v504
    %v537 = vpack.c.b16 %v507, %v505
    %v538 = vpack.c.b16 %v510, %v508
    %v539 = vpack.c.b16 %v511, %v509
    %v540 = vpack.c.b16 %v514, %v512
    %v541 = vpack.c.b16 %v515, %v513
    %v542 = vpack.c.b16 %v518, %v516
    %v543 = vpack.c.b16 %v519, %v517
    %v544 = vpack.c.b16 %v522, %v520
    %v545 = vpack.c.b16 %v523, %v521
    %v546 = vpack.c.b16 %v526, %v524
    %v547 = vpack.c.b16 %v527, %v525
    %v548 = vpack.c.b16 %v530, %v528
    %v549 = vpack.c.b16 %v531, %v529
    %v550 = vpack.c.b16 %v534, %v532
    %v551 = vpack.c.b16 %v535, %v533
    %568 = vmatprep.subr.bf16.mxu0 %v537
    %569 = vmatpush1.bf16.msra.mxu0 %v536
    %570 = vmatprep.subr.bf16.mxu0 %v539
    %571 = vmatpush1.bf16.msra.mxu0 %v538
    %572 = vmatprep.subr.bf16.mxu0 %v541
    %573 = vmatpush1.bf16.msra.mxu0 %v540
    %574 = vmatprep.subr.bf16.mxu0 %v543
    %575 = vmatpush1.bf16.msra.mxu0 %v542
    %576 = vmatprep.subr.bf16.mxu0 %v545
    %577 = vmatpush1.bf16.msra.mxu0 %v544
    %578 = vmatprep.subr.bf16.mxu0 %v547
    %579 = vmatpush1.bf16.msra.mxu0 %v546
    %580 = vmatprep.subr.bf16.mxu0 %v549
    %581 = vmatpush1.bf16.msra.mxu0 %v548
    %582 = vmatprep.subr.bf16.mxu0 %v551
    %583 = vmatpush1.bf16.msra.mxu0 %v550
    %584 = vmatprep.subr.bf16.mxu0 0
    %585 = vmatpush1.bf16.msra.mxu0 0
    %586 = vmatprep.subr.bf16.mxu0 0
    %587 = vmatpush1.bf16.msra.mxu0 0
    %588 = vmatprep.subr.bf16.mxu0 0
    %589 = vmatpush1.bf16.msra.mxu0 0
    %590 = vmatprep.subr.bf16.mxu0 0
    %591 = vmatpush1.bf16.msra.mxu0 0
    %592 = vmatprep.subr.bf16.mxu0 0
    %593 = vmatpush1.bf16.msra.mxu0 0
    %594 = vmatprep.subr.bf16.mxu0 0
    %595 = vmatpush1.bf16.msra.mxu0 0
    %596 = vmatprep.subr.bf16.mxu0 0
    %597 = vmatpush1.bf16.msra.mxu0 0
    %598 = vmatprep.subr.bf16.mxu0 0
    %599 = vmatpush1.bf16.msra.mxu0 0
    %600 = vmatprep.mubr.bf16.mxu0 0
    %601 = vmatmul.mubr.bf16.gmra.mrb[0].mxu0 %v475
    %v602 = vpop.f32.mrb[0].mxu0
    %v603 = vadd.f32 %v481, %v602
    %v604 = vpop.f32.mrb[0].mxu0
    %v605 = vadd.f32 %v485, %v604
    %v606 = vpop.f32.mrb[0].mxu0
    %v607 = vadd.f32 %v481, %v606
    %v608 = vpop.f32.mrb[0].mxu0
    %v609 = vadd.f32 %v485, %v608
    %610 = vmatprep.mubr.bf16.mxu0 0
    %611 = vmatmul.mubr.bf16.gmra.mrb[0].mxu0 %v476
    %v612 = vpop.f32.mrb[0].mxu0
    %v613 = vadd.f32 %v481, %v612
    %v614 = vpop.f32.mrb[0].mxu0
    %v615 = vadd.f32 %v485, %v614
    %v616 = vpop.f32.mrb[0].mxu0
    %v617 = vadd.f32 %v481, %v616
    %v618 = vpop.f32.mrb[0].mxu0
    %v619 = vadd.f32 %v485, %v618
    %620 = vdwg.mxu0
    %v621 = vxor.u32 %v603, 2147483648
    %v622 = vxor.u32 %v607, 2147483648
    %v623 = vxor.u32 %v613, 2147483648
    %v624 = vxor.u32 %v617, 2147483648
    %v625 = vmul.f32 %v621, 1.442695
    %v626 = vpow.pop %v625
    %v627 = vmul.f32 %v622, 1.442695
    %v628 = vpow.pop %v627
    %v629 = vmul.f32 %v623, 1.442695
    %v630 = vpow.pop %v629
    %v631 = vmul.f32 %v624, 1.442695
    %v632 = vpow.pop %v631
    %v633 = vadd.f32 %v626, 1.0
    %v634 = vadd.f32 %v628, 1.0
    %v635 = vadd.f32 %v630, 1.0
    %v636 = vadd.f32 %v632, 1.0
    %v637 = vrcp.pop %v633
    %v638 = vmul.f32 1.0, %v637
    %v639 = vrcp.pop %v634
    %v640 = vmul.f32 1.0, %v639
    %v641 = vrcp.pop %v635
    %v642 = vmul.f32 1.0, %v641
    %v643 = vrcp.pop %v636
    %v644 = vmul.f32 1.0, %v643
    %v645 = vmax.f32 %v605, 0.0
    %v646 = vmax.f32 %v609, 0.0
    %v647 = vmax.f32 %v615, 0.0
    %v648 = vmax.f32 %v619, 0.0
    %v649 = vsub.f32 %v645, %v452
    %v650 = vsub.f32 %v646, %v453
    %v651 = vsub.f32 %v647, %v454
    %v652 = vsub.f32 %v648, %v455
    %v653 = vmul.f32 %v638, %v649
    %v654 = vmul.f32 %v640, %v650
    %v655 = vmul.f32 %v642, %v651
    %v656 = vmul.f32 %v644, %v652
    %v657 = vadd.f32 %v452, %v653
    %v658 = vadd.f32 %v453, %v654
    %v659 = vadd.f32 %v454, %v655
    %v660 = vadd.f32 %v455, %v656
    %661 = vst [vmem:[#allocation7] sm:$0xff] %v657
    %662 = vst [vmem:[#allocation7 + $0x8] sm:$0xff] %v658
    %663 = vst [vmem:[#allocation7 + $0x10] sm:$0xff] %v659
    %664 = vst [vmem:[#allocation7 + $0x18] sm:$0xff] %v660
    // Predicated region
    $region22: #{tpu_custom_call.1} parent=1 // pred_check
      _
    $region23: #{tpu_custom_call.1} parent=1 // pred_check_branch
      %666 = sbr.rel (0) target = $region25
    $region24: #{tpu_custom_call.1} parent=1 // pred_region
      %s668 = ssub.s32 512, 512
      %669 = vsyncadd [#allocation4], %s668
      %s670 = sshll.u32 [#allocation7], 4
      %s671 = int_to_ptr.vmem [resolvable:$true] %s670
      %676 = dma.vmem_to_hbm [thread:$0]  %s671, 512, %s3, [#allocation4], 128, 128, 8
    $region25: #{tpu_custom_call.1} parent=1 // pred_fallthru
      _
    // Predicated region
    $region26: #{tpu_custom_call.1} parent=1 // pred_check
      _
    $region27: #{tpu_custom_call.1} parent=1 // pred_check_branch
      %678 = sbr.rel (0) target = $region29
    $region28: #{tpu_custom_call.1} parent=1 // pred_region
      %679 = dma.done [#allocation4], 512
    $region29: #{tpu_custom_call.1} parent=1 // pred_fallthru
      _
    %680 = vsyncpa [#allocation3], 1
    %681 = vsyncpa [#allocation6], 1
    %682 = vsyncpa [#allocation4], 1

</llo_original>
